<compile_context>
chip_gen: v6e
topology: v6e:2x2x1
jax: 0.10.0
libtpu: 0.0.40
codegen_flags: <defaults>
</compile_context>

<pallas_src>
import jax
import jax.numpy as jnp
from jax.experimental import pallas as pl
from jax.experimental.pallas import tpu as pltpu

INPUT_DIM = 512
HIDDEN_DIM = 256


def _round_up(n, m):
    return ((n + m - 1) // m) * m


def mlp_kernel(x_ref, w1_ref, b1_ref, w2r_ref, b2_ref, o_ref):
    # MXU: (TB,512)bf16 @ (512,256)bf16 with f32 accumulation.
    h = jnp.dot(x_ref[...], w1_ref[...], preferred_element_type=jnp.float32)
    # VPU: bias add + ReLU in f32.
    h = jnp.maximum(h + b1_ref[...], 0.0)
    # Second linear has output width 1: a full MXU pass would waste >99% of its
    # result columns, so do it as VPU multiply + XLU lane reduction instead.
    out = jnp.sum(h * w2r_ref[...], axis=-1, keepdims=True) + b2_ref[0, 0]
    o_ref[...] = out.astype(o_ref.dtype)


def simple_model_forward(x, w1, b1, w2, b2, *, tb=512):
    """Pallas equivalent of SimpleModel.forward.

    x : (B, INPUT_DIM) f32
    w1: (INPUT_DIM, HIDDEN_DIM) f32, b1: (1, HIDDEN_DIM) f32
    w2: (HIDDEN_DIM, 1) f32,         b2: (1, 1) f32
    returns (B, 1) f32

    Batch is tiled over the grid (parallel axis -> megacore sharding on v7x);
    weights/biases use constant index maps so they stay VMEM-resident across
    grid steps. x/w1 are cast to bf16 at the boundary (f32 accumulation in-kernel).
    """
    B = x.shape[0]
    # MXU-friendly batch tile: 512 rows for large B, otherwise the whole batch
    # rounded up to a sublane multiple (8) so the BlockSpec tiling rule holds.
    TB = tb if B >= tb else _round_up(max(B, 8), 8)
    Bp = _round_up(B, TB)

    x_p = x if Bp == B else jnp.pad(x, ((0, Bp - B), (0, 0)))
    x_bf = x_p.astype(jnp.bfloat16)
    w1_bf = w1.astype(jnp.bfloat16)
    w2_row = w2.reshape(1, HIDDEN_DIM).astype(jnp.float32)
    b2_s = b2.reshape(1, 1).astype(jnp.float32)

    out = pl.pallas_call(
        mlp_kernel,
        out_shape=jax.ShapeDtypeStruct((Bp, 1), jnp.float32),
        grid=(Bp // TB,),
        in_specs=[
            # Batch-tiled activations: double-buffered DMA overlaps compute.
            pl.BlockSpec((TB, INPUT_DIM), lambda i: (i, 0)),
            # Weights / biases: constant block index -> resident across steps.
            pl.BlockSpec((INPUT_DIM, HIDDEN_DIM), lambda i: (0, 0)),
            pl.BlockSpec((1, HIDDEN_DIM), lambda i: (0, 0)),
            pl.BlockSpec((1, HIDDEN_DIM), lambda i: (0, 0)),
            # Single scalar bias lives in SMEM (no VMEM tile / vreg broadcast).
            pl.BlockSpec(memory_space=pltpu.MemorySpace.SMEM),
        ],
        out_specs=pl.BlockSpec((TB, 1), lambda i: (i, 0)),
        compiler_params=pltpu.CompilerParams(
            # Batch tiles are independent -> shard across TensorCores on v7x.
            dimension_semantics=("parallel",),
            # Per-tile VMEM: 2x(TB*512*2B) x + 256 KiB w1 + out; well under the
            # 16/32 MiB scoped defaults on v5e/v6e/v7x for TB<=512.
        ),
    )(x_bf, w1_bf, b1.astype(jnp.float32), w2_row, b2_s)

    return out[:B] if Bp != B else out


def init_params(key):
    """Deterministic init mimicking nn.Linear's uniform(-1/sqrt(fan_in), 1/sqrt(fan_in))."""
    k1, k2, k3, k4 = jax.random.split(key, 4)
    bound1 = 1.0 / (INPUT_DIM ** 0.5)
    bound2 = 1.0 / (HIDDEN_DIM ** 0.5)
    w1 = jax.random.uniform(k1, (INPUT_DIM, HIDDEN_DIM), jnp.float32, -bound1, bound1)
    b1 = jax.random.uniform(k2, (1, HIDDEN_DIM), jnp.float32, -bound1, bound1)
    w2 = jax.random.uniform(k3, (HIDDEN_DIM, 1), jnp.float32, -bound2, bound2)
    b2 = jax.random.uniform(k4, (1, 1), jnp.float32, -bound2, bound2)
    return w1, b1, w2, b2


if __name__ == "__main__":
    key = jax.random.PRNGKey(0)
    kx, kp = jax.random.split(key)
    batch = 8
    x = jax.random.normal(kx, (batch, INPUT_DIM), jnp.float32)
    w1, b1, w2, b2 = init_params(kp)

    out = simple_model_forward(x, w1, b1, w2, b2)
    out = jax.block_until_ready(out)

    # Reference check in plain JAX (same math as the PyTorch module, f32).
    ref = jnp.maximum(x @ w1 + b1, 0.0) @ w2 + b2
    assert out.shape == (batch, 1)
    # bf16 inputs to the first matmul -> loosen tolerance vs. the f32 reference.
    assert jnp.allclose(out, ref, atol=2e-2, rtol=2e-2)

    print("KERNEL_OK")
</pallas_src>

<mosaic_0001>
module attributes {stable_mosaic.version = 11 : i64} {
  func.func @mlp_kernel(%arg0: i32, %arg1: memref<8x512xbf16, #tpu.memory_space<vmem>>, %arg2: memref<512x256xbf16, #tpu.memory_space<vmem>>, %arg3: memref<1x256xf32, #tpu.memory_space<vmem>>, %arg4: memref<1x256xf32, #tpu.memory_space<vmem>>, %arg5: memref<1x1xf32, #tpu.memory_space<smem>>, %arg6: memref<8x1xf32, #tpu.memory_space<vmem>>) attributes {dimension_semantics = [#tpu.dimension_semantics<parallel>], iteration_bounds = array<i64: 1>, scalar_prefetch = 0 : i64, scratch_operands = 0 : i64, tpu.core_type = #tpu.core_type<tc>, window_params = [{transform_indices = @transform_0, window_bounds = array<i64: 8, 512>}, {pipeline_mode = #tpu.pipeline_mode<synchronous>, transform_indices = @transform_1, window_bounds = array<i64: 512, 256>}, {pipeline_mode = #tpu.pipeline_mode<synchronous>, transform_indices = @transform_2, window_bounds = array<i64: 1, 256>}, {pipeline_mode = #tpu.pipeline_mode<synchronous>, transform_indices = @transform_3, window_bounds = array<i64: 1, 256>}, {transform_indices = @transform_4, window_bounds = array<i64: 1, 1>}, {transform_indices = @transform_5, window_bounds = array<i64: 8, 1>}]} {
    %c0 = arith.constant 0 : index
    %c0_0 = arith.constant 0 : index
    %0 = vector.load %arg1[%c0, %c0_0] : memref<8x512xbf16, #tpu.memory_space<vmem>>, vector<8x512xbf16>
    %c0_1 = arith.constant 0 : index
    %c0_2 = arith.constant 0 : index
    %1 = vector.load %arg2[%c0_1, %c0_2] : memref<512x256xbf16, #tpu.memory_space<vmem>>, vector<512x256xbf16>
    %cst = arith.constant dense<0.000000e+00> : vector<8x256xf32>
    %2 = tpu.matmul %0, %1, %cst {dimension_numbers = #tpu.dot_dimension_numbers<[1], [0], [0], [1], [0, 0, 1, 1], [], []>} : vector<8x512xbf16>, vector<512x256xbf16>, vector<8x256xf32> -> vector<8x256xf32>
    %c0_3 = arith.constant 0 : index
    %c0_4 = arith.constant 0 : index
    %3 = vector.load %arg3[%c0_3, %c0_4] : memref<1x256xf32, #tpu.memory_space<vmem>>, vector<1x256xf32>
    %4 = vector.broadcast %3 : vector<1x256xf32> to vector<8x256xf32>
    %5 = arith.addf %2, %4 : vector<8x256xf32>
    %cst_5 = arith.constant 0.000000e+00 : f32
    %6 = vector.broadcast %cst_5 : f32 to vector<8x256xf32>
    %7 = arith.maximumf %5, %6 : vector<8x256xf32>
    %c0_6 = arith.constant 0 : index
    %c0_7 = arith.constant 0 : index
    %8 = vector.load %arg4[%c0_6, %c0_7] : memref<1x256xf32, #tpu.memory_space<vmem>>, vector<1x256xf32>
    %9 = vector.broadcast %8 : vector<1x256xf32> to vector<8x256xf32>
    %10 = arith.mulf %7, %9 : vector<8x256xf32>
    %cst_8 = arith.constant dense<0.000000e+00> : vector<8xf32>
    %11 = vector.multi_reduction <add>, %10, %cst_8 [1] : vector<8x256xf32> to vector<8xf32>
    %12 = vector.shape_cast %11 : vector<8xf32> to vector<8x1xf32>
    %c0_9 = arith.constant 0 : index
    %c0_10 = arith.constant 0 : index
    %13 = memref.load %arg5[%c0_9, %c0_10] : memref<1x1xf32, #tpu.memory_space<smem>>
    %14 = vector.broadcast %13 : f32 to vector<8x1xf32>
    %15 = arith.addf %12, %14 : vector<8x1xf32>
    %c0_11 = arith.constant 0 : index
    %c0_12 = arith.constant 0 : index
    %16 = vector.load %arg6[%c0_11, %c0_12] : memref<8x1xf32, #tpu.memory_space<vmem>>, vector<8x1xf32>
    tpu.vector_store %arg6[%c0_11, %c0_12], %15 {strides = array<i32>} : memref<8x1xf32, #tpu.memory_space<vmem>>, vector<8x1xf32>,
    return
  }
  func.func @transform_0(%arg0: i32) -> (i32, i32) {
    %c0_i32 = arith.constant 0 : i32
    %c0_i32_0 = arith.constant 0 : i32
    return %arg0, %c0_i32 : i32, i32
  }
  func.func @transform_1(%arg0: i32) -> (i32, i32) {
    %c0_i32 = arith.constant 0 : i32
    %c0_i32_0 = arith.constant 0 : i32
    %c0_i32_1 = arith.constant 0 : i32
    return %c0_i32, %c0_i32_0 : i32, i32
  }
  func.func @transform_2(%arg0: i32) -> (i32, i32) {
    %c0_i32 = arith.constant 0 : i32
    %c0_i32_0 = arith.constant 0 : i32
    %c0_i32_1 = arith.constant 0 : i32
    return %c0_i32, %c0_i32_0 : i32, i32
  }
  func.func @transform_3(%arg0: i32) -> (i32, i32) {
    %c0_i32 = arith.constant 0 : i32
    %c0_i32_0 = arith.constant 0 : i32
    %c0_i32_1 = arith.constant 0 : i32
    return %c0_i32, %c0_i32_0 : i32, i32
  }
  func.func @transform_4(%arg0: i32) -> (i32, i32) {
    %c0_i32 = arith.constant 0 : i32
    %c0_i32_0 = arith.constant 0 : i32
    %c0_i32_1 = arith.constant 0 : i32
    return %c0_i32, %c0_i32_0 : i32, i32
  }
  func.func @transform_5(%arg0: i32) -> (i32, i32) {
    %c0_i32 = arith.constant 0 : i32
    %c0_i32_0 = arith.constant 0 : i32
    return %arg0, %c0_i32 : i32, i32
  }
}

</mosaic_0001>

<llo_original>
// kernel: tpu_custom_call.1
$region0: #{tpu_custom_call.1}
  #allocation0 [shape = 'u32[]', space=smem, size = 0x4, offset = 0x4, fixed_abs, tag = 'smem constant byte address 0x4 - core index']
  #allocation1 [shape = 'u32[144,128]{1,0:T(1,128)}', space=vmem, size = 0x12000, scoped, tag = 'internal scratch']
  #allocation2 [shape = 'f32[1,1]{1,0:T(1,128)S(6)}', space=smem, size = 0x200, scoped, tag = 'scoped memory for tpu_custom_call.1']
  %s0 = inlined_call_operand.hbm [shape: bf16[8,512], index: 0, kind: input, shape index: {}]
  %s1 = inlined_call_operand.hbm [shape: bf16[512,256], index: 1, kind: input, shape index: {}]
  %s2 = inlined_call_operand.vmem [shape: f32[1,256], index: 2, kind: input, shape index: {}]
  %s3 = inlined_call_operand.vmem [shape: f32[1,256], index: 3, kind: input, shape index: {}]
  %s4 = inlined_call_operand.<no memory space> [shape: f32[1,1], index: 4, kind: input, shape index: {}]
  %s5 = inlined_call_operand.vmem [shape: f32[8,1], index: 5, kind: output, shape index: {}]
  %s6 = sld [smem:[#allocation0]]
  $region38: #{tpu_custom_call.1} parent=0
    _
  %s8 = ssub.s32 1, %s6
  %s9 = scalar_select 0, %s8, %s6
  %10 = sst [smem:[#allocation2]] %s4
  $region1: #{tpu_custom_call.1} parent=0
    #allocation3 [shape = 'u8[8192]{0}', space=vmem, size = 0x2000, scoped, tag = 'input window, operand 0, single buffered']
    #allocation4 [shape = 's32[1]{0}', space=sflag, size = 0x4, scoped, tag = 'scoped memory for tpu_custom_call.1']
    #allocation5 [shape = 'u8[262144]{0}', space=vmem, size = 0x40000, scoped, tag = 'input window, operand 1, single buffered']
    #allocation6 [shape = 's32[1]{0}', space=sflag, size = 0x4, scoped, tag = 'scoped memory for tpu_custom_call.1']
    %11 = vsyncpa [#allocation4], 0
    %12 = vsyncpa [#allocation6], 0
    // Predicated region
    $region2: #{tpu_custom_call.1} parent=1 // pred_check
      _
    $region3: #{tpu_custom_call.1} parent=1 // pred_check_branch
      %14 = sbr.rel (0) target = $region5
    $region4: #{tpu_custom_call.1} parent=1 // pred_region
      %s16 = ssub.s32 256, 256
      %17 = vsyncadd [#allocation4], %s16
      %s19 = sshll.u32 [#allocation3], 4
      %s20 = int_to_ptr.vmem [resolvable:$true] %s19
      %22 = dma.hbm_to_vmem [thread:$0]  %s0, 256, %s20, [#allocation4]
    $region5: #{tpu_custom_call.1} parent=1 // pred_fallthru
      _
    // Predicated region
    $region6: #{tpu_custom_call.1} parent=1 // pred_check
      _
    $region7: #{tpu_custom_call.1} parent=1 // pred_check_branch
      %24 = sbr.rel (0) target = $region9
    $region8: #{tpu_custom_call.1} parent=1 // pred_region
      %s26 = ssub.s32 8192, 8192
      %27 = vsyncadd [#allocation6], %s26
      %s28 = sshll.u32 [#allocation5], 4
      %s29 = int_to_ptr.vmem [resolvable:$true] %s28
      %34 = dma.hbm_to_vmem [thread:$0]  %s1, 8192, %s29, [#allocation6], 128, 128, 8
    $region9: #{tpu_custom_call.1} parent=1 // pred_fallthru
      _
    // Predicated region
    $region10: #{tpu_custom_call.1} parent=1 // pred_check
      _
    $region11: #{tpu_custom_call.1} parent=1 // pred_check_branch
      %36 = sbr.rel (0) target = $region13
    $region12: #{tpu_custom_call.1} parent=1 // pred_region
      _
    $region13: #{tpu_custom_call.1} parent=1 // pred_fallthru
      _
    // Predicated region
    $region14: #{tpu_custom_call.1} parent=1 // pred_check
      _
    $region15: #{tpu_custom_call.1} parent=1 // pred_check_branch
      %38 = sbr.rel (0) target = $region17
    $region16: #{tpu_custom_call.1} parent=1 // pred_region
      _
    $region17: #{tpu_custom_call.1} parent=1 // pred_fallthru
      _
    // Predicated region
    $region18: #{tpu_custom_call.1} parent=1 // pred_check
      _
    $region19: #{tpu_custom_call.1} parent=1 // pred_check_branch
      %40 = sbr.rel (0) target = $region21
    $region20: #{tpu_custom_call.1} parent=1 // pred_region
      _
    $region21: #{tpu_custom_call.1} parent=1 // pred_fallthru
      _
    // Predicated region
    $region22: #{tpu_custom_call.1} parent=1 // pred_check
      _
    $region23: #{tpu_custom_call.1} parent=1 // pred_check_branch
      %42 = sbr.rel (0) target = $region25
    $region24: #{tpu_custom_call.1} parent=1 // pred_region
      %43 = dma.done [#allocation4], 256
    $region25: #{tpu_custom_call.1} parent=1 // pred_fallthru
      _
    // Predicated region
    $region26: #{tpu_custom_call.1} parent=1 // pred_check
      _
    $region27: #{tpu_custom_call.1} parent=1 // pred_check_branch
      %45 = sbr.rel (0) target = $region29
    $region28: #{tpu_custom_call.1} parent=1 // pred_region
      %46 = dma.done [#allocation6], 8192
    $region29: #{tpu_custom_call.1} parent=1 // pred_fallthru
      _
    %v47 = vld [vmem:[#allocation3] sm:$0xff]
    %v48 = vld [vmem:[#allocation3 + $0x8] sm:$0xff]
    %v49 = vld [vmem:[#allocation5] sm:$0xff]
    %v50 = vld [vmem:[#allocation5 + $0x8] sm:$0xff]
    %v51 = vld [vmem:[#allocation5 + $0x10] sm:$0xff]
    %v52 = vld [vmem:[#allocation5 + $0x18] sm:$0xff]
    %v53 = vld [vmem:[#allocation5 + $0x20] sm:$0xff]
    %v54 = vld [vmem:[#allocation5 + $0x28] sm:$0xff]
    %v55 = vld [vmem:[#allocation5 + $0x30] sm:$0xff]
    %v56 = vld [vmem:[#allocation5 + $0x38] sm:$0xff]
    %v57 = vld [vmem:[#allocation5 + $0x40] sm:$0xff]
    %v58 = vld [vmem:[#allocation5 + $0x48] sm:$0xff]
    %v59 = vld [vmem:[#allocation5 + $0x50] sm:$0xff]
    %v60 = vld [vmem:[#allocation5 + $0x58] sm:$0xff]
    %v61 = vld [vmem:[#allocation5 + $0x60] sm:$0xff]
    %v62 = vld [vmem:[#allocation5 + $0x68] sm:$0xff]
    %v63 = vld [vmem:[#allocation5 + $0x70] sm:$0xff]
    %v64 = vld [vmem:[#allocation5 + $0x78] sm:$0xff]
    %v65 = vld [vmem:[#allocation5 + $0x80] sm:$0xff]
    %v66 = vld [vmem:[#allocation5 + $0x88] sm:$0xff]
    %v67 = vld [vmem:[#allocation5 + $0x90] sm:$0xff]
    %v68 = vld [vmem:[#allocation5 + $0x98] sm:$0xff]
    %v69 = vld [vmem:[#allocation5 + $0xa0] sm:$0xff]
    %v70 = vld [vmem:[#allocation5 + $0xa8] sm:$0xff]
    %v71 = vld [vmem:[#allocation5 + $0xb0] sm:$0xff]
    %v72 = vld [vmem:[#allocation5 + $0xb8] sm:$0xff]
    %v73 = vld [vmem:[#allocation5 + $0xc0] sm:$0xff]
    %v74 = vld [vmem:[#allocation5 + $0xc8] sm:$0xff]
    %v75 = vld [vmem:[#allocation5 + $0xd0] sm:$0xff]
    %v76 = vld [vmem:[#allocation5 + $0xd8] sm:$0xff]
    %v77 = vld [vmem:[#allocation5 + $0xe0] sm:$0xff]
    %v78 = vld [vmem:[#allocation5 + $0xe8] sm:$0xff]
    %v79 = vld [vmem:[#allocation5 + $0xf0] sm:$0xff]
    %v80 = vld [vmem:[#allocation5 + $0xf8] sm:$0xff]
    %v81 = vld [vmem:[#allocation5 + $0x100] sm:$0xff]
    %v82 = vld [vmem:[#allocation5 + $0x108] sm:$0xff]
    %v83 = vld [vmem:[#allocation5 + $0x110] sm:$0xff]
    %v84 = vld [vmem:[#allocation5 + $0x118] sm:$0xff]
    %v85 = vld [vmem:[#allocation5 + $0x120] sm:$0xff]
    %v86 = vld [vmem:[#allocation5 + $0x128] sm:$0xff]
    %v87 = vld [vmem:[#allocation5 + $0x130] sm:$0xff]
    %v88 = vld [vmem:[#allocation5 + $0x138] sm:$0xff]
    %v89 = vld [vmem:[#allocation5 + $0x140] sm:$0xff]
    %v90 = vld [vmem:[#allocation5 + $0x148] sm:$0xff]
    %v91 = vld [vmem:[#allocation5 + $0x150] sm:$0xff]
    %v92 = vld [vmem:[#allocation5 + $0x158] sm:$0xff]
    %v93 = vld [vmem:[#allocation5 + $0x160] sm:$0xff]
    %v94 = vld [vmem:[#allocation5 + $0x168] sm:$0xff]
    %v95 = vld [vmem:[#allocation5 + $0x170] sm:$0xff]
    %v96 = vld [vmem:[#allocation5 + $0x178] sm:$0xff]
    %v97 = vld [vmem:[#allocation5 + $0x180] sm:$0xff]
    %v98 = vld [vmem:[#allocation5 + $0x188] sm:$0xff]
    %v99 = vld [vmem:[#allocation5 + $0x190] sm:$0xff]
    %v100 = vld [vmem:[#allocation5 + $0x198] sm:$0xff]
    %v101 = vld [vmem:[#allocation5 + $0x1a0] sm:$0xff]
    %v102 = vld [vmem:[#allocation5 + $0x1a8] sm:$0xff]
    %v103 = vld [vmem:[#allocation5 + $0x1b0] sm:$0xff]
    %v104 = vld [vmem:[#allocation5 + $0x1b8] sm:$0xff]
    %v105 = vld [vmem:[#allocation5 + $0x1c0] sm:$0xff]
    %v106 = vld [vmem:[#allocation5 + $0x1c8] sm:$0xff]
    %v107 = vld [vmem:[#allocation5 + $0x1d0] sm:$0xff]
    %v108 = vld [vmem:[#allocation5 + $0x1d8] sm:$0xff]
    %v109 = vld [vmem:[#allocation5 + $0x1e0] sm:$0xff]
    %v110 = vld [vmem:[#allocation5 + $0x1e8] sm:$0xff]
    %v111 = vld [vmem:[#allocation5 + $0x1f0] sm:$0xff]
    %v112 = vld [vmem:[#allocation5 + $0x1f8] sm:$0xff]
    %v113 = vld [vmem:[%s2] sm:$0x3]
    %v115 = vlaneseq
    %v116 = vshrl.u32 %v115, 7
    %v117 = vsub.s32 0, %v116
    %v118 = vrot.slane %v113, %v117
    %v119 = vlaneseq
    %v120 = vshrl.u32 %v119, 7
    %v121 = vsub.s32 1, %v120
    %v122 = vrot.slane %v113, %v121
    %v127 = vunpack.c.l.b16 %v47
    %v128 = vunpack.c.h.b16 %v47
    %v129 = vunpack.c.l.b16 %v48
    %v130 = vunpack.c.h.b16 %v48
    %v131 = vpack.c.b16 %v127, %v127
    %v132 = vpack.c.b16 %v128, %v128
    %v133 = vpack.c.b16 %v129, %v129
    %v134 = vpack.c.b16 %v130, %v130
    %v203 = vunpack.c.l.b16 %v49
    %v204 = vunpack.c.h.b16 %v49
    %v205 = vunpack.c.l.b16 %v50
    %v206 = vunpack.c.h.b16 %v50
    %v207 = vunpack.c.l.b16 %v51
    %v208 = vunpack.c.h.b16 %v51
    %v209 = vunpack.c.l.b16 %v52
    %v210 = vunpack.c.h.b16 %v52
    %v211 = vunpack.c.l.b16 %v53
    %v212 = vunpack.c.h.b16 %v53
    %v213 = vunpack.c.l.b16 %v54
    %v214 = vunpack.c.h.b16 %v54
    %v215 = vunpack.c.l.b16 %v55
    %v216 = vunpack.c.h.b16 %v55
    %v217 = vunpack.c.l.b16 %v56
    %v218 = vunpack.c.h.b16 %v56
    %v219 = vunpack.c.l.b16 %v57
    %v220 = vunpack.c.h.b16 %v57
    %v221 = vunpack.c.l.b16 %v58
    %v222 = vunpack.c.h.b16 %v58
    %v223 = vunpack.c.l.b16 %v59
    %v224 = vunpack.c.h.b16 %v59
    %v225 = vunpack.c.l.b16 %v60
    %v226 = vunpack.c.h.b16 %v60
    %v227 = vunpack.c.l.b16 %v61
    %v228 = vunpack.c.h.b16 %v61
    %v229 = vunpack.c.l.b16 %v62
    %v230 = vunpack.c.h.b16 %v62
    %v231 = vunpack.c.l.b16 %v63
    %v232 = vunpack.c.h.b16 %v63
    %v233 = vunpack.c.l.b16 %v64
    %v234 = vunpack.c.h.b16 %v64
    %v235 = vunpack.c.l.b16 %v65
    %v236 = vunpack.c.h.b16 %v65
    %v237 = vunpack.c.l.b16 %v66
    %v238 = vunpack.c.h.b16 %v66
    %v239 = vunpack.c.l.b16 %v67
    %v240 = vunpack.c.h.b16 %v67
    %v241 = vunpack.c.l.b16 %v68
    %v242 = vunpack.c.h.b16 %v68
    %v243 = vunpack.c.l.b16 %v69
    %v244 = vunpack.c.h.b16 %v69
    %v245 = vunpack.c.l.b16 %v70
    %v246 = vunpack.c.h.b16 %v70
    %v247 = vunpack.c.l.b16 %v71
    %v248 = vunpack.c.h.b16 %v71
    %v249 = vunpack.c.l.b16 %v72
    %v250 = vunpack.c.h.b16 %v72
    %v251 = vunpack.c.l.b16 %v73
    %v252 = vunpack.c.h.b16 %v73
    %v253 = vunpack.c.l.b16 %v74
    %v254 = vunpack.c.h.b16 %v74
    %v255 = vunpack.c.l.b16 %v75
    %v256 = vunpack.c.h.b16 %v75
    %v257 = vunpack.c.l.b16 %v76
    %v258 = vunpack.c.h.b16 %v76
    %v259 = vunpack.c.l.b16 %v77
    %v260 = vunpack.c.h.b16 %v77
    %v261 = vunpack.c.l.b16 %v78
    %v262 = vunpack.c.h.b16 %v78
    %v263 = vunpack.c.l.b16 %v79
    %v264 = vunpack.c.h.b16 %v79
    %v265 = vunpack.c.l.b16 %v80
    %v266 = vunpack.c.h.b16 %v80
    %v267 = vunpack.c.l.b16 %v81
    %v268 = vunpack.c.h.b16 %v81
    %v269 = vunpack.c.l.b16 %v82
    %v270 = vunpack.c.h.b16 %v82
    %v271 = vunpack.c.l.b16 %v83
    %v272 = vunpack.c.h.b16 %v83
    %v273 = vunpack.c.l.b16 %v84
    %v274 = vunpack.c.h.b16 %v84
    %v275 = vunpack.c.l.b16 %v85
    %v276 = vunpack.c.h.b16 %v85
    %v277 = vunpack.c.l.b16 %v86
    %v278 = vunpack.c.h.b16 %v86
    %v279 = vunpack.c.l.b16 %v87
    %v280 = vunpack.c.h.b16 %v87
    %v281 = vunpack.c.l.b16 %v88
    %v282 = vunpack.c.h.b16 %v88
    %v283 = vunpack.c.l.b16 %v89
    %v284 = vunpack.c.h.b16 %v89
    %v285 = vunpack.c.l.b16 %v90
    %v286 = vunpack.c.h.b16 %v90
    %v287 = vunpack.c.l.b16 %v91
    %v288 = vunpack.c.h.b16 %v91
    %v289 = vunpack.c.l.b16 %v92
    %v290 = vunpack.c.h.b16 %v92
    %v291 = vunpack.c.l.b16 %v93
    %v292 = vunpack.c.h.b16 %v93
    %v293 = vunpack.c.l.b16 %v94
    %v294 = vunpack.c.h.b16 %v94
    %v295 = vunpack.c.l.b16 %v95
    %v296 = vunpack.c.h.b16 %v95
    %v297 = vunpack.c.l.b16 %v96
    %v298 = vunpack.c.h.b16 %v96
    %v299 = vunpack.c.l.b16 %v97
    %v300 = vunpack.c.h.b16 %v97
    %v301 = vunpack.c.l.b16 %v98
    %v302 = vunpack.c.h.b16 %v98
    %v303 = vunpack.c.l.b16 %v99
    %v304 = vunpack.c.h.b16 %v99
    %v305 = vunpack.c.l.b16 %v100
    %v306 = vunpack.c.h.b16 %v100
    %v307 = vunpack.c.l.b16 %v101
    %v308 = vunpack.c.h.b16 %v101
    %v309 = vunpack.c.l.b16 %v102
    %v310 = vunpack.c.h.b16 %v102
    %v311 = vunpack.c.l.b16 %v103
    %v312 = vunpack.c.h.b16 %v103
    %v313 = vunpack.c.l.b16 %v104
    %v314 = vunpack.c.h.b16 %v104
    %v315 = vunpack.c.l.b16 %v105
    %v316 = vunpack.c.h.b16 %v105
    %v317 = vunpack.c.l.b16 %v106
    %v318 = vunpack.c.h.b16 %v106
    %v319 = vunpack.c.l.b16 %v107
    %v320 = vunpack.c.h.b16 %v107
    %v321 = vunpack.c.l.b16 %v108
    %v322 = vunpack.c.h.b16 %v108
    %v323 = vunpack.c.l.b16 %v109
    %v324 = vunpack.c.h.b16 %v109
    %v325 = vunpack.c.l.b16 %v110
    %v326 = vunpack.c.h.b16 %v110
    %v327 = vunpack.c.l.b16 %v111
    %v328 = vunpack.c.h.b16 %v111
    %v329 = vunpack.c.l.b16 %v112
    %v330 = vunpack.c.h.b16 %v112
    %v331 = vpack.c.b16 %v205, %v203
    %v332 = vpack.c.b16 %v206, %v204
    %v333 = vpack.c.b16 %v209, %v207
    %v334 = vpack.c.b16 %v210, %v208
    %v335 = vpack.c.b16 %v213, %v211
    %v336 = vpack.c.b16 %v214, %v212
    %v337 = vpack.c.b16 %v217, %v215
    %v338 = vpack.c.b16 %v218, %v216
    %v339 = vpack.c.b16 %v221, %v219
    %v340 = vpack.c.b16 %v222, %v220
    %v341 = vpack.c.b16 %v225, %v223
    %v342 = vpack.c.b16 %v226, %v224
    %v343 = vpack.c.b16 %v229, %v227
    %v344 = vpack.c.b16 %v230, %v228
    %v345 = vpack.c.b16 %v233, %v231
    %v346 = vpack.c.b16 %v234, %v232
    %v347 = vpack.c.b16 %v237, %v235
    %v348 = vpack.c.b16 %v238, %v236
    %v349 = vpack.c.b16 %v241, %v239
    %v350 = vpack.c.b16 %v242, %v240
    %v351 = vpack.c.b16 %v245, %v243
    %v352 = vpack.c.b16 %v246, %v244
    %v353 = vpack.c.b16 %v249, %v247
    %v354 = vpack.c.b16 %v250, %v248
    %v355 = vpack.c.b16 %v253, %v251
    %v356 = vpack.c.b16 %v254, %v252
    %v357 = vpack.c.b16 %v257, %v255
    %v358 = vpack.c.b16 %v258, %v256
    %v359 = vpack.c.b16 %v261, %v259
    %v360 = vpack.c.b16 %v262, %v260
    %v361 = vpack.c.b16 %v265, %v263
    %v362 = vpack.c.b16 %v266, %v264
    %v363 = vpack.c.b16 %v269, %v267
    %v364 = vpack.c.b16 %v270, %v268
    %v365 = vpack.c.b16 %v273, %v271
    %v366 = vpack.c.b16 %v274, %v272
    %v367 = vpack.c.b16 %v277, %v275
    %v368 = vpack.c.b16 %v278, %v276
    %v369 = vpack.c.b16 %v281, %v279
    %v370 = vpack.c.b16 %v282, %v280
    %v371 = vpack.c.b16 %v285, %v283
    %v372 = vpack.c.b16 %v286, %v284
    %v373 = vpack.c.b16 %v289, %v287
    %v374 = vpack.c.b16 %v290, %v288
    %v375 = vpack.c.b16 %v293, %v291
    %v376 = vpack.c.b16 %v294, %v292
    %v377 = vpack.c.b16 %v297, %v295
    %v378 = vpack.c.b16 %v298, %v296
    %v379 = vpack.c.b16 %v301, %v299
    %v380 = vpack.c.b16 %v302, %v300
    %v381 = vpack.c.b16 %v305, %v303
    %v382 = vpack.c.b16 %v306, %v304
    %v383 = vpack.c.b16 %v309, %v307
    %v384 = vpack.c.b16 %v310, %v308
    %v385 = vpack.c.b16 %v313, %v311
    %v386 = vpack.c.b16 %v314, %v312
    %v387 = vpack.c.b16 %v317, %v315
    %v388 = vpack.c.b16 %v318, %v316
    %v389 = vpack.c.b16 %v321, %v319
    %v390 = vpack.c.b16 %v322, %v320
    %v391 = vpack.c.b16 %v325, %v323
    %v392 = vpack.c.b16 %v326, %v324
    %v393 = vpack.c.b16 %v329, %v327
    %v394 = vpack.c.b16 %v330, %v328
    %459 = vmatprep.subr.bf16.mxu0 %v346
    %460 = vmatpush1.bf16.msra.mxu0 %v345
    %461 = vmatprep.subr.bf16.mxu0 %v344
    %462 = vmatpush1.bf16.msra.mxu0 %v343
    %463 = vmatprep.subr.bf16.mxu0 %v342
    %464 = vmatpush1.bf16.msra.mxu0 %v341
    %465 = vmatprep.subr.bf16.mxu0 %v340
    %466 = vmatpush1.bf16.msra.mxu0 %v339
    %467 = vmatprep.subr.bf16.mxu0 %v338
    %468 = vmatpush1.bf16.msra.mxu0 %v337
    %469 = vmatprep.subr.bf16.mxu0 %v336
    %470 = vmatpush1.bf16.msra.mxu0 %v335
    %471 = vmatprep.subr.bf16.mxu0 %v334
    %472 = vmatpush1.bf16.msra.mxu0 %v333
    %473 = vmatprep.subr.bf16.mxu0 %v332
    %474 = vmatpush1.bf16.msra.mxu0 %v331
    %475 = vmatprep.subr.bf16.mxu0 %v362
    %476 = vmatpush2.bf16.msra.mxu0 %v361
    %477 = vmatprep.subr.bf16.mxu0 %v360
    %478 = vmatpush2.bf16.msra.mxu0 %v359
    %479 = vmatprep.subr.bf16.mxu0 %v358
    %480 = vmatpush2.bf16.msra.mxu0 %v357
    %481 = vmatprep.subr.bf16.mxu0 %v356
    %482 = vmatpush2.bf16.msra.mxu0 %v355
    %483 = vmatprep.subr.bf16.mxu0 %v354
    %484 = vmatpush2.bf16.msra.mxu0 %v353
    %485 = vmatprep.subr.bf16.mxu0 %v352
    %486 = vmatpush2.bf16.msra.mxu0 %v351
    %487 = vmatprep.subr.bf16.mxu0 %v350
    %488 = vmatpush2.bf16.msra.mxu0 %v349
    %489 = vmatprep.subr.bf16.mxu0 %v348
    %490 = vmatpush2.bf16.msra.mxu0 %v347
    %491 = vmatprep.mubr.bf16.mxu0 %v132
    %492 = vmatmul.mubr.bf16.gmra.mxu0 %v131
    %v493 = vpop.f32.mrf.mxu0
    %v494 = vadd.f32 %v118, %v493
    %v495 = vpop.f32.mrf.mxu0
    %v496 = vadd.f32 %v122, %v495
    %v497 = vpop.f32.mrf.mxu0
    %v498 = vpop.f32.mrf.mxu0
    %499 = vdwg.mxu0
    %500 = vmatprep.subr.bf16.mxu0 %v378
    %501 = vmatpush1.bf16.msra.mxu0 %v377
    %502 = vmatprep.subr.bf16.mxu0 %v376
    %503 = vmatpush1.bf16.msra.mxu0 %v375
    %504 = vmatprep.subr.bf16.mxu0 %v374
    %505 = vmatpush1.bf16.msra.mxu0 %v373
    %506 = vmatprep.subr.bf16.mxu0 %v372
    %507 = vmatpush1.bf16.msra.mxu0 %v371
    %508 = vmatprep.subr.bf16.mxu0 %v370
    %509 = vmatpush1.bf16.msra.mxu0 %v369
    %510 = vmatprep.subr.bf16.mxu0 %v368
    %511 = vmatpush1.bf16.msra.mxu0 %v367
    %512 = vmatprep.subr.bf16.mxu0 %v366
    %513 = vmatpush1.bf16.msra.mxu0 %v365
    %514 = vmatprep.subr.bf16.mxu0 %v364
    %515 = vmatpush1.bf16.msra.mxu0 %v363
    %516 = vmatprep.subr.bf16.mxu0 %v394
    %517 = vmatpush2.bf16.msra.mxu0 %v393
    %518 = vmatprep.subr.bf16.mxu0 %v392
    %519 = vmatpush2.bf16.msra.mxu0 %v391
    %520 = vmatprep.subr.bf16.mxu0 %v390
    %521 = vmatpush2.bf16.msra.mxu0 %v389
    %522 = vmatprep.subr.bf16.mxu0 %v388
    %523 = vmatpush2.bf16.msra.mxu0 %v387
    %524 = vmatprep.subr.bf16.mxu0 %v386
    %525 = vmatpush2.bf16.msra.mxu0 %v385
    %526 = vmatprep.subr.bf16.mxu0 %v384
    %527 = vmatpush2.bf16.msra.mxu0 %v383
    %528 = vmatprep.subr.bf16.mxu0 %v382
    %529 = vmatpush2.bf16.msra.mxu0 %v381
    %530 = vmatprep.subr.bf16.mxu0 %v380
    %531 = vmatpush2.bf16.msra.mxu0 %v379
    %532 = vmatprep.mubr.bf16.mxu0 %v134
    %533 = vmatmul.mubr.bf16.gmra.mxu0 %v133
    %v534 = vpop.f32.mrf.mxu0
    %v535 = vadd.f32 %v494, %v534
    %v536 = vpop.f32.mrf.mxu0
    %v537 = vadd.f32 %v496, %v536
    %v538 = vpop.f32.mrf.mxu0
    %v539 = vpop.f32.mrf.mxu0
    %540 = vdwg.mxu0
    %v541 = vmax.f32 %v535, 0.0
    %v542 = vmax.f32 %v537, 0.0
    %v543 = vld [vmem:[%s3] sm:$0x3]
    %v545 = vlaneseq
    %v546 = vshrl.u32 %v545, 7
    %v547 = vsub.s32 0, %v546
    %v548 = vrot.slane %v543, %v547
    %v549 = vlaneseq
    %v550 = vshrl.u32 %v549, 7
    %v551 = vsub.s32 1, %v550
    %v552 = vrot.slane %v543, %v551
    %v555 = vmul.f32 %v541, %v548
    %v556 = vmul.f32 %v542, %v552
    %v557 = vadd.f32 %v555, %v556
    %558 = vadd.xlane.f32.xlu0 %v557
    %v559 = vpop.xlane.xlu0 %558
    %s560 = sld [smem:[#allocation2]]
    %v561 = vstv %s560
    %v562 = vadd.f32 %v559, %v561
    %vm563 = vcmask 7168
    %564 = vst.msk [vmem:[%s5] sm:$0xff] %vm563, %v562
    // Predicated region
    $region30: #{tpu_custom_call.1} parent=1 // pred_check
      _
    $region31: #{tpu_custom_call.1} parent=1 // pred_check_branch
      %566 = sbr.rel (0) target = $region33
    $region32: #{tpu_custom_call.1} parent=1 // pred_region
      _
    $region33: #{tpu_custom_call.1} parent=1 // pred_fallthru
      _
    // Predicated region
    $region34: #{tpu_custom_call.1} parent=1 // pred_check
      _
    $region35: #{tpu_custom_call.1} parent=1 // pred_check_branch
      %568 = sbr.rel (0) target = $region37
    $region36: #{tpu_custom_call.1} parent=1 // pred_region
      _
    $region37: #{tpu_custom_call.1} parent=1 // pred_fallthru
      _
    %569 = vsyncpa [#allocation4], 1
    %570 = vsyncpa [#allocation6], 1

</llo_original>
